<compile_context>
chip_gen: v5e
topology: v5e:2x2
jax: 0.10.0
libtpu: 0.0.40
codegen_flags: <defaults>
</compile_context>

<pallas_src>
import functools
import math

import jax
import jax.numpy as jnp
from jax import lax
from jax.experimental import pallas as pl
from jax.experimental.pallas import tpu as pltpu

BOARD_SIZE = 19

# -----------------------------------------------------------------------------
# Tile sizing (bytes-based) and VMEM budgeting.
# -----------------------------------------------------------------------------
_TARGET_STEP_BYTES = 8 << 20    # activation bytes streamed per batch-grid step
_BOARD_STEP_BYTES = 8 << 20     # board-block bytes per feature (k) step


def _pick_batch_tile(batch, row_bytes, *, target_step_bytes=_TARGET_STEP_BYTES):
    """Rows per batch-grid step.

    batch <= 128 -> single step (block dims == array dims, no alignment issue).
    batch  > 128 -> a multiple of 128 sized so one step streams ~target bytes,
                    capped at round128(ceil(batch/2)) so the grid always has
                    >= 2 steps and v7x can shard the 'parallel' batch axis
                    across its two TensorCores.
    """
    if batch <= 128:
        return batch
    tb = max(128, (target_step_bytes // max(row_bytes, 1)) // 128 * 128)
    half = max(128, (-(-batch // 2)) // 128 * 128)
    return min(tb, half)


def _pick_feature_tile(rows, feat, itemsize, *, budget_bytes=_BOARD_STEP_BYTES):
    """Board-feature columns per k step (full width if it fits the budget)."""
    if rows * feat * itemsize <= budget_bytes:
        return feat
    fk = max(128, (budget_bytes // max(rows * itemsize, 1)) // 128 * 128)
    return min(fk, feat)


def _vmem_limit(bytes_needed):
    """Explicit scoped-VMEM limit: estimate + headroom, in [32 MiB, 96 MiB].

    The tile pickers keep the estimate around <= ~40 MiB, which fits v7x's
    64 MiB physical VMEM and is well under the 128 MiB on v5e/v6e.
    """
    return int(min(max(bytes_needed + (8 << 20), 32 << 20), 96 << 20))


# -----------------------------------------------------------------------------
# combine == 'concat':
#   logits[b] = sum_f board[b,f]*w_board[f] + sum_f text[b,f]*w_text[f] + bias
# Grid: (batch tiles, board-feature tiles).  The (1, TB) output block is
# resident across k and used directly as the accumulator.
# -----------------------------------------------------------------------------
def _concat_kernel(board_ref, text_ref, wb_ref, wt_ref, bias_ref, out_ref,
                   *, fb_total, fkb, need_mask):
    # board_ref: (TB, FKB) activation k-tile (any float dtype, e.g. bf16)
    # text_ref:  (TB, Ft)  resident across k (index map constant in k)
    # wb_ref:    (1, FKB)  board-weight k-row     wt_ref: (1, Ft)
    # bias_ref:  (1, 1) scalar in SMEM
    # out_ref:   (1, TB)   lane-dense logits slab, accumulated across k
    k = pl.program_id(1)

    @pl.when(k == 0)
    def _init():
        xt = text_ref[...].astype(jnp.float32)
        wt = wt_ref[...].astype(jnp.float32)
        base = jnp.sum(xt * wt, axis=1) + bias_ref[0, 0]
        out_ref[...] = base[None, :]

    prod = board_ref[...].astype(jnp.float32) * wb_ref[...].astype(jnp.float32)
    if need_mask:
        # Edge k tile: bytes past Fb are undefined (possibly NaN/Inf) in both
        # operands; select on the product so junk never reaches the reduction.
        lane = lax.broadcasted_iota(jnp.int32, prod.shape, 1) + k * fkb
        prod = jnp.where(lane < fb_total, prod, 0.0)
    out_ref[...] += jnp.sum(prod, axis=1)[None, :]


def concat_forward(board_embedding, text_embedding, fc_w, fc_b, *,
                   batch_tile=None, board_feature_tile=None):
    """fc_w: (1, Fb+Ft) torch nn.Linear weight, fc_b: (1,) bias.

    Activations are streamed in their incoming dtype (pass bf16 to halve HBM
    traffic); the kernel upcasts to f32 before reducing.
    """
    B = board_embedding.shape[0]
    board_flat = board_embedding.reshape(B, -1)
    text_flat = text_embedding.reshape(B, -1)
    Fb = board_flat.shape[1]
    Ft = text_flat.shape[1]
    act_item = board_flat.dtype.itemsize
    w_item = fc_w.dtype.itemsize

    # Fuse the concatenation: split the (1, Fb+Ft) weight row instead of
    # materializing cat(board, text) in HBM.
    w_board = fc_w[:, :Fb]
    w_text = fc_w[:, Fb:]
    bias = fc_b.reshape(1, 1).astype(jnp.float32)

    tb = batch_tile if batch_tile is not None else _pick_batch_tile(
        B, (Fb + Ft) * act_item)
    fkb = (board_feature_tile if board_feature_tile is not None
           else _pick_feature_tile(tb, Fb, act_item))
    if tb < B:
        assert tb % 128 == 0, "batch tile must be a multiple of 128 when tiling"
    if fkb < Fb:
        assert fkb % 128 == 0, "feature tile must be a multiple of 128 when tiling"
    grid = (pl.cdiv(B, tb), pl.cdiv(Fb, fkb))
    need_mask = (Fb % fkb) != 0

    kernel = functools.partial(_concat_kernel, fb_total=Fb, fkb=fkb,
                               need_mask=need_mask)

    vmem_need = (2 * tb * (fkb + Ft) * act_item        # double-buffered activations
                 + 2 * (fkb + Ft) * w_item             # weight blocks
                 + 2 * tb * 4 + (1 << 16))             # output block + slack
    cost = pl.CostEstimate(
        flops=int(2 * B * (Fb + Ft)),
        transcendentals=0,
        bytes_accessed=int(B * (Fb + Ft) * act_item
                           + grid[0] * (Fb + Ft) * w_item + B * 4))

    out_row = pl.pallas_call(
        kernel,
        out_shape=jax.ShapeDtypeStruct((1, B), jnp.float32),
        grid=grid,
        in_specs=[
            pl.BlockSpec((tb, fkb), lambda i, k: (i, k)),
            pl.BlockSpec((tb, Ft), lambda i, k: (i, 0)),
            pl.BlockSpec((1, fkb), lambda i, k: (0, k)),
            pl.BlockSpec((1, Ft), lambda i, k: (0, 0)),
            pl.BlockSpec(memory_space=pltpu.MemorySpace.SMEM),
        ],
        out_specs=pl.BlockSpec((1, tb), lambda i, k: (0, i)),
        compiler_params=pltpu.CompilerParams(
            dimension_semantics=("parallel", "arbitrary"),
            vmem_limit_bytes=_vmem_limit(vmem_need)),
        cost_estimate=cost,
    )(board_flat, text_flat, w_board, w_text, bias)
    return out_row.reshape(B, 1)


# -----------------------------------------------------------------------------
# combine == 'dot':
#   bp = board_flat @ Wb.T + bb ; tp = text_flat @ Wt.T + bt
#   logits[b] = <bp[b], tp[b]>
# Grid: (batch tiles, board-feature tiles).  The board projection accumulates
# in a (TB, D) f32 scratch across k; the text projection + final dot happen at
# the last k step.
# -----------------------------------------------------------------------------
def _dot_kernel(board_ref, text_ref, wbT_ref, wtT_ref, bb_ref, bt_ref, out_ref,
                acc_ref, *, fb_total, fkb, need_mask):
    # board_ref: (TB, FKB)   wbT_ref: (FKB, D)   bb_ref: (1, D)
    # text_ref:  (TB, Ft)    wtT_ref: (Ft, D)    bt_ref: (1, D)
    # out_ref:   (1, TB)     acc_ref: (TB, D) f32 scratch
    k = pl.program_id(1)
    nk = pl.num_programs(1)

    xb = board_ref[...]
    wkb = wbT_ref[...]
    if need_mask:
        # Edge k tile: zero BOTH operands past Fb — undefined data (possibly
        # NaN) on either side would otherwise pollute every output lane
        # through the contraction.
        col = lax.broadcasted_iota(jnp.int32, xb.shape, 1) + k * fkb
        xb = jnp.where(col < fb_total, xb, jnp.zeros_like(xb))
        row = lax.broadcasted_iota(jnp.int32, wkb.shape, 0) + k * fkb
        wkb = jnp.where(row < fb_total, wkb, jnp.zeros_like(wkb))

    @pl.when(k == 0)
    def _init():
        acc_ref[...] = jnp.zeros_like(acc_ref)

    acc_ref[...] += jnp.dot(xb, wkb, preferred_element_type=jnp.float32)

    @pl.when(k == nk - 1)
    def _finalize():
        bp = acc_ref[...] + bb_ref[...]
        tp = jnp.dot(text_ref[...], wtT_ref[...],
                     preferred_element_type=jnp.float32) + bt_ref[...]
        out_ref[...] = jnp.sum(bp * tp, axis=1)[None, :]


def dot_forward(board_embedding, text_embedding, wb, bb, wt, bt, *,
                batch_tile=None, board_feature_tile=None):
    """wb: (d_model, Fb), wt: (d_model, Ft) torch nn.Linear weights (not transposed)."""
    B = board_embedding.shape[0]
    board_flat = board_embedding.reshape(B, -1)
    text_flat = text_embedding.reshape(B, -1)
    Fb = board_flat.shape[1]
    Ft = text_flat.shape[1]
    D = wb.shape[0]
    act_item = board_flat.dtype.itemsize

    # One-time wrapper-side transpose to (F, D): canonical (1,)x(0,) contraction
    # in the kernel, so Mosaic never re-transposes the streamed weight block.
    wbT = wb.T                               # (Fb, D)
    wtT = wt.T                               # (Ft, D)
    bb2 = bb.reshape(1, D).astype(jnp.float32)
    bt2 = bt.reshape(1, D).astype(jnp.float32)

    tb = batch_tile if batch_tile is not None else _pick_batch_tile(
        B, (Fb + Ft) * act_item)
    fkb = (board_feature_tile if board_feature_tile is not None
           else _pick_feature_tile(tb, Fb, act_item))
    if tb < B:
        assert tb % 128 == 0, "batch tile must be a multiple of 128 when tiling"
    if fkb < Fb:
        assert fkb % 128 == 0, "feature tile must be a multiple of 128 when tiling"
    grid = (pl.cdiv(B, tb), pl.cdiv(Fb, fkb))
    need_mask = (Fb % fkb) != 0

    kernel = functools.partial(_dot_kernel, fb_total=Fb, fkb=fkb,
                               need_mask=need_mask)

    # TODO(synk): at the module's default sizes (sentence_len=100,
    # text_hidden_dim=200, d_model=512) the (Ft, D) text weight is still held
    # whole per batch tile; tile it along Ft too if it ever exceeds the budget.
    vmem_need = (2 * tb * (fkb + Ft) * act_item          # activations (double-buffered)
                 + 2 * (fkb + Ft + 2) * D * 4            # weight/bias blocks
                 + tb * D * 4                            # accumulator scratch
                 + 2 * tb * 4 + (1 << 16))
    cost = pl.CostEstimate(
        flops=int(2 * B * (Fb + Ft) * D + 3 * B * D),
        transcendentals=0,
        bytes_accessed=int(B * (Fb + Ft) * act_item
                           + grid[0] * (D * (Fb + Ft) + 2 * D) * 4 + B * 4))

    out_row = pl.pallas_call(
        kernel,
        out_shape=jax.ShapeDtypeStruct((1, B), jnp.float32),
        grid=grid,
        in_specs=[
            pl.BlockSpec((tb, fkb), lambda i, k: (i, k)),
            pl.BlockSpec((tb, Ft), lambda i, k: (i, 0)),
            pl.BlockSpec((fkb, D), lambda i, k: (k, 0)),
            pl.BlockSpec((Ft, D), lambda i, k: (0, 0)),
            pl.BlockSpec((1, D), lambda i, k: (0, 0)),
            pl.BlockSpec((1, D), lambda i, k: (0, 0)),
        ],
        out_specs=pl.BlockSpec((1, tb), lambda i, k: (0, i)),
        scratch_shapes=[pltpu.VMEM((tb, D), jnp.float32)],
        compiler_params=pltpu.CompilerParams(
            dimension_semantics=("parallel", "arbitrary"),
            vmem_limit_bytes=_vmem_limit(vmem_need)),
        cost_estimate=cost,
    )(board_flat, text_flat, wbT, wtT, bb2, bt2)
    return out_row.reshape(B, 1)


# -----------------------------------------------------------------------------
# Deterministic nn.Linear-style parameter init: U(-1/sqrt(fan_in), 1/sqrt(fan_in))
# -----------------------------------------------------------------------------
def linear_params(key, out_features, in_features):
    kw, kb = jax.random.split(key)
    bound = 1.0 / math.sqrt(in_features)
    w = jax.random.uniform(kw, (out_features, in_features), jnp.float32,
                           minval=-bound, maxval=bound)
    b = jax.random.uniform(kb, (out_features,), jnp.float32,
                           minval=-bound, maxval=bound)
    return w, b


# -----------------------------------------------------------------------------
# Pure-JAX references (correctness checking only).
# -----------------------------------------------------------------------------
def concat_ref(board, text, w, b):
    B = board.shape[0]
    cat = jnp.concatenate([board.reshape(B, -1), text.reshape(B, -1)],
                          axis=1).astype(jnp.float32)
    return jnp.dot(cat, w.T, precision=lax.Precision.HIGHEST) + b


def dot_ref(board, text, wb, bb, wt, bt):
    B = board.shape[0]
    bp = jnp.dot(board.reshape(B, -1).astype(jnp.float32), wb.T,
                 precision=lax.Precision.HIGHEST) + bb
    tp = jnp.dot(text.reshape(B, -1).astype(jnp.float32), wt.T,
                 precision=lax.Precision.HIGHEST) + bt
    return jnp.sum(bp * tp, axis=1, keepdims=True)


if __name__ == "__main__":
    # Small, module-consistent shapes.
    batch = 2
    board_embed_size = 8      # channel dim of the 19x19 board embedding
    sentence_len = 8          # self.text_hidden_size
    text_hidden_dim = 16      # self.text_embed_size
    d_model = 32

    key = jax.random.PRNGKey(0)
    k_board, k_text, k_fc, k_fcb, k_fct = jax.random.split(key, 5)

    board_embedding = jax.random.normal(
        k_board, (batch, BOARD_SIZE, BOARD_SIZE, board_embed_size), jnp.float32)
    text_embedding = jax.random.normal(
        k_text, (batch, sentence_len, text_hidden_dim), jnp.float32)

    Fb = BOARD_SIZE * BOARD_SIZE * board_embed_size
    Ft = sentence_len * text_hidden_dim

    fc_w, fc_b = linear_params(k_fc, 1, Fb + Ft)
    wb, bb = linear_params(k_fcb, d_model, Fb)
    wt, bt = linear_params(k_fct, d_model, Ft)

    # ----- combine == 'concat' (module default), small f32 batch -----
    out = jax.block_until_ready(
        concat_forward(board_embedding, text_embedding, fc_w, fc_b))
    ref = concat_ref(board_embedding, text_embedding, fc_w, fc_b)
    assert out.shape == (batch, 1)
    assert jnp.allclose(out, ref, atol=2e-3, rtol=2e-3)

    # ----- combine == 'dot', small f32 batch -----
    out = jax.block_until_ready(
        dot_forward(board_embedding, text_embedding, wb, bb, wt, bt))
    ref = dot_ref(board_embedding, text_embedding, wb, bb, wt, bt)
    assert out.shape == (batch, 1)
    assert jnp.allclose(out, ref, atol=1e-2, rtol=1e-2)

    # ----- tiled path: multi-step batch grid + board-feature reduction grid,
    #       with masked edge tiles on both axes -----
    big_batch = 200   # one full 128-row tile + one masked 72-row edge tile
    kb2, kt2 = jax.random.split(jax.random.PRNGKey(1))
    board_big = jax.random.normal(
        kb2, (big_batch, BOARD_SIZE, BOARD_SIZE, board_embed_size), jnp.float32)
    text_big = jax.random.normal(
        kt2, (big_batch, sentence_len, text_hidden_dim), jnp.float32)

    out = jax.block_until_ready(
        concat_forward(board_big, text_big, fc_w, fc_b,
                       batch_tile=128, board_feature_tile=1024))
    ref = concat_ref(board_big, text_big, fc_w, fc_b)
    assert out.shape == (big_batch, 1)
    assert jnp.allclose(out, ref, atol=2e-3, rtol=2e-3)

    out = jax.block_until_ready(
        dot_forward(board_big, text_big, wb, bb, wt, bt,
                    batch_tile=128, board_feature_tile=1024))
    ref = dot_ref(board_big, text_big, wb, bb, wt, bt)
    assert out.shape == (big_batch, 1)
    assert jnp.allclose(out, ref, atol=1e-2, rtol=1e-2)

    # ----- bf16 activation streaming (auto tiling; halves HBM traffic) -----
    board_bf16 = board_big.astype(jnp.bfloat16)
    text_bf16 = text_big.astype(jnp.bfloat16)

    out = jax.block_until_ready(
        concat_forward(board_bf16, text_bf16, fc_w, fc_b))
    ref = concat_ref(board_bf16, text_bf16, fc_w, fc_b)
    assert out.shape == (big_batch, 1)
    assert jnp.allclose(out, ref, atol=2e-3, rtol=2e-3)

    out = jax.block_until_ready(
        dot_forward(board_bf16, text_bf16, wb, bb, wt, bt))
    ref = dot_ref(board_bf16, text_bf16, wb, bb, wt, bt)
    assert out.shape == (big_batch, 1)
    assert jnp.allclose(out, ref, atol=1e-2, rtol=1e-2)

    print("KERNEL_OK")
</pallas_src>

<mosaic_0001>
module attributes {stable_mosaic.version = 11 : i64} {
  func.func @_concat_kernel(%arg0: i32, %arg1: i32, %arg2: memref<2x2888xf32, #tpu.memory_space<vmem>>, %arg3: memref<2x128xf32, #tpu.memory_space<vmem>>, %arg4: memref<1x2888xf32, #tpu.memory_space<vmem>>, %arg5: memref<1x128xf32, #tpu.memory_space<vmem>>, %arg6: memref<1x1xf32, #tpu.memory_space<smem>>, %arg7: memref<1x2xf32, #tpu.memory_space<vmem>>) attributes {dimension_semantics = [#tpu.dimension_semantics<parallel>, #tpu.dimension_semantics<arbitrary>], iteration_bounds = array<i64: 1, 1>, scalar_prefetch = 0 : i64, scratch_operands = 0 : i64, tpu.core_type = #tpu.core_type<tc>, window_params = [{transform_indices = @transform_0, window_bounds = array<i64: 2, 2888>}, {transform_indices = @transform_1, window_bounds = array<i64: 2, 128>}, {transform_indices = @transform_2, window_bounds = array<i64: 1, 2888>}, {pipeline_mode = #tpu.pipeline_mode<synchronous>, transform_indices = @transform_3, window_bounds = array<i64: 1, 128>}, {transform_indices = @transform_4, window_bounds = array<i64: 1, 1>}, {transform_indices = @transform_5, window_bounds = array<i64: 1, 2>}]} {
    %c0_i32 = arith.constant 0 : i32
    %0 = arith.cmpi eq, %arg1, %c0_i32 : i32
    %1 = arith.extui %0 : i1 to i32
    %c0_i32_0 = arith.constant 0 : i32
    %2 = arith.cmpi ne, %1, %c0_i32_0 : i32
    scf.if %2 {
      %c0_8 = arith.constant 0 : index
      %c0_9 = arith.constant 0 : index
      %12 = vector.load %arg3[%c0_8, %c0_9] : memref<2x128xf32, #tpu.memory_space<vmem>>, vector<2x128xf32>
      %c0_10 = arith.constant 0 : index
      %c0_11 = arith.constant 0 : index
      %13 = vector.load %arg5[%c0_10, %c0_11] : memref<1x128xf32, #tpu.memory_space<vmem>>, vector<1x128xf32>
      %14 = vector.broadcast %13 : vector<1x128xf32> to vector<2x128xf32>
      %15 = arith.mulf %12, %14 : vector<2x128xf32>
      %cst_12 = arith.constant dense<0.000000e+00> : vector<2xf32>
      %16 = vector.multi_reduction <add>, %15, %cst_12 [1] : vector<2x128xf32> to vector<2xf32>
      %c0_13 = arith.constant 0 : index
      %c0_14 = arith.constant 0 : index
      %17 = memref.load %arg6[%c0_13, %c0_14] : memref<1x1xf32, #tpu.memory_space<smem>>
      %18 = vector.broadcast %17 : f32 to vector<2xf32>
      %19 = arith.addf %16, %18 : vector<2xf32>
      %20 = vector.shape_cast %19 : vector<2xf32> to vector<1x2xf32>
      %c0_15 = arith.constant 0 : index
      %c0_16 = arith.constant 0 : index
      %21 = vector.load %arg7[%c0_15, %c0_16] : memref<1x2xf32, #tpu.memory_space<vmem>>, vector<1x2xf32>
      tpu.vector_store %arg7[%c0_15, %c0_16], %20 {strides = array<i32>} : memref<1x2xf32, #tpu.memory_space<vmem>>, vector<1x2xf32>,
    } else {
    }
    %c0 = arith.constant 0 : index
    %c0_1 = arith.constant 0 : index
    %3 = vector.load %arg2[%c0, %c0_1] : memref<2x2888xf32, #tpu.memory_space<vmem>>, vector<2x2888xf32>
    %c0_2 = arith.constant 0 : index
    %c0_3 = arith.constant 0 : index
    %4 = vector.load %arg4[%c0_2, %c0_3] : memref<1x2888xf32, #tpu.memory_space<vmem>>, vector<1x2888xf32>
    %5 = vector.broadcast %4 : vector<1x2888xf32> to vector<2x2888xf32>
    %6 = arith.mulf %3, %5 : vector<2x2888xf32>
    %c0_4 = arith.constant 0 : index
    %c0_5 = arith.constant 0 : index
    %7 = vector.load %arg7[%c0_4, %c0_5] : memref<1x2xf32, #tpu.memory_space<vmem>>, vector<1x2xf32>
    %cst = arith.constant dense<0.000000e+00> : vector<2xf32>
    %8 = vector.multi_reduction <add>, %6, %cst [1] : vector<2x2888xf32> to vector<2xf32>
    %9 = vector.shape_cast %8 : vector<2xf32> to vector<1x2xf32>
    %10 = arith.addf %7, %9 : vector<1x2xf32>
    %c0_6 = arith.constant 0 : index
    %c0_7 = arith.constant 0 : index
    %11 = vector.load %arg7[%c0_6, %c0_7] : memref<1x2xf32, #tpu.memory_space<vmem>>, vector<1x2xf32>
    tpu.vector_store %arg7[%c0_6, %c0_7], %10 {strides = array<i32>} : memref<1x2xf32, #tpu.memory_space<vmem>>, vector<1x2xf32>,
    return
  }
  func.func @transform_0(%arg0: i32, %arg1: i32) -> (i32, i32) {
    %c0_i32 = arith.constant 0 : i32
    return %arg0, %arg1 : i32, i32
  }
  func.func @transform_1(%arg0: i32, %arg1: i32) -> (i32, i32) {
    %c0_i32 = arith.constant 0 : i32
    %c0_i32_0 = arith.constant 0 : i32
    return %arg0, %c0_i32 : i32, i32
  }
  func.func @transform_2(%arg0: i32, %arg1: i32) -> (i32, i32) {
    %c0_i32 = arith.constant 0 : i32
    %c0_i32_0 = arith.constant 0 : i32
    return %c0_i32, %arg1 : i32, i32
  }
  func.func @transform_3(%arg0: i32, %arg1: i32) -> (i32, i32) {
    %c0_i32 = arith.constant 0 : i32
    %c0_i32_0 = arith.constant 0 : i32
    %c0_i32_1 = arith.constant 0 : i32
    return %c0_i32, %c0_i32_0 : i32, i32
  }
  func.func @transform_4(%arg0: i32, %arg1: i32) -> (i32, i32) {
    %c0_i32 = arith.constant 0 : i32
    %c0_i32_0 = arith.constant 0 : i32
    %c0_i32_1 = arith.constant 0 : i32
    return %c0_i32, %c0_i32_0 : i32, i32
  }
  func.func @transform_5(%arg0: i32, %arg1: i32) -> (i32, i32) {
    %c0_i32 = arith.constant 0 : i32
    %c0_i32_0 = arith.constant 0 : i32
    return %c0_i32, %arg0 : i32, i32
  }
}

</mosaic_0001>

<llo_original>
// kernel: tpu_custom_call.1
$region0: #{tpu_custom_call.1}
  #allocation0 [shape = 'u32[]', space=smem, size = 0x4, offset = 0x4, fixed_abs, tag = 'smem constant byte address 0x4 - core index']
  #allocation1 [shape = 'u32[72,128]{1,0:T(1,128)}', space=vmem, size = 0x9000, scoped, tag = 'internal scratch']
  #allocation2 [shape = 'f32[1,1]{1,0:T(1,128)S(6)}', space=smem, size = 0x200, scoped, tag = 'scoped memory for tpu_custom_call.1']
  %s0 = inlined_call_operand.hbm [shape: f32[2,2888], index: 0, kind: input, shape index: {}]
  %s1 = inlined_call_operand.vmem [shape: f32[2,128], index: 1, kind: input, shape index: {}]
  %s2 = inlined_call_operand.hbm [shape: f32[1,2888], index: 2, kind: input, shape index: {}]
  %s3 = inlined_call_operand.vmem [shape: f32[1,128], index: 3, kind: input, shape index: {}]
  %s4 = inlined_call_operand.<no memory space> [shape: f32[1,1], index: 4, kind: input, shape index: {}]
  %s5 = inlined_call_operand.hbm [shape: f32[1,2], index: 5, kind: output, shape index: {}]
  %s6 = sld [smem:[#allocation0]]
  $region42: #{tpu_custom_call.1} parent=0
    _
  %s8 = ssub.s32 1, %s6
  %s9 = scalar_select 0, %s8, %s6
  %10 = sst [smem:[#allocation2]] %s4
  $region1: #{tpu_custom_call.1} parent=0
    #allocation3 [shape = 'u8[23552]{0}', space=vmem, size = 0x5c00, scoped, tag = 'input window, operand 0, single buffered']
    #allocation4 [shape = 's32[1]{0}', space=sflag, size = 0x4, scoped, tag = 'scoped memory for tpu_custom_call.1']
    #allocation5 [shape = 's32[1]{0}', space=sflag, size = 0x4, scoped, tag = 'scoped memory for tpu_custom_call.1']
    #allocation6 [shape = 'u8[11776]{0}', space=vmem, size = 0x3000, scoped, tag = 'input window, operand 2, single buffered']
    #allocation7 [shape = 's32[1]{0}', space=sflag, size = 0x4, scoped, tag = 'scoped memory for tpu_custom_call.1']
    #allocation8 [shape = 'u8[512]{0}', space=vmem, size = 0x400, scoped, tag = 'output window, operand 0, single buffered']
    %11 = vsyncpa [#allocation4], 0
    %12 = vsyncpa [#allocation7], 0
    %13 = vsyncpa [#allocation5], 0
    // Predicated region
    $region2: #{tpu_custom_call.1} parent=1 // pred_check
      _
    $region3: #{tpu_custom_call.1} parent=1 // pred_check_branch
      %15 = sbr.rel (0) target = $region5
    $region4: #{tpu_custom_call.1} parent=1 // pred_region
      %17 = vsyncadd [#allocation4], 0
      %s19 = sshll.u32 %s0, 4
      %s20 = int_to_ptr.hbm [resolvable:$true] %s19
      %s21 = sshll.u32 [#allocation3], 4
      %s22 = int_to_ptr.vmem [resolvable:$true] %s21
      %24 = dma.hbm_to_vmem [thread:$0]  %s20, 736, %s22, [#allocation4]
    $region5: #{tpu_custom_call.1} parent=1 // pred_fallthru
      _
    // Predicated region
    $region6: #{tpu_custom_call.1} parent=1 // pred_check
      _
    $region7: #{tpu_custom_call.1} parent=1 // pred_check_branch
      %26 = sbr.rel (0) target = $region9
    $region8: #{tpu_custom_call.1} parent=1 // pred_region
      _
    $region9: #{tpu_custom_call.1} parent=1 // pred_fallthru
      _
    // Predicated region
    $region10: #{tpu_custom_call.1} parent=1 // pred_check
      _
    $region11: #{tpu_custom_call.1} parent=1 // pred_check_branch
      %28 = sbr.rel (0) target = $region13
    $region12: #{tpu_custom_call.1} parent=1 // pred_region
      %30 = vsyncadd [#allocation7], 0
      %s32 = sshll.u32 %s2, 4
      %s33 = int_to_ptr.hbm [resolvable:$true] %s32
      %s34 = sshll.u32 [#allocation6], 4
      %s35 = int_to_ptr.vmem [resolvable:$true] %s34
      %37 = dma.hbm_to_vmem [thread:$0]  %s33, 368, %s35, [#allocation7]
    $region13: #{tpu_custom_call.1} parent=1 // pred_fallthru
      _
    // Predicated region
    $region14: #{tpu_custom_call.1} parent=1 // pred_check
      _
    $region15: #{tpu_custom_call.1} parent=1 // pred_check_branch
      %39 = sbr.rel (0) target = $region17
    $region16: #{tpu_custom_call.1} parent=1 // pred_region
      _
    $region17: #{tpu_custom_call.1} parent=1 // pred_fallthru
      _
    // Predicated region
    $region18: #{tpu_custom_call.1} parent=1 // pred_check
      _
    $region19: #{tpu_custom_call.1} parent=1 // pred_check_branch
      %41 = sbr.rel (0) target = $region21
    $region20: #{tpu_custom_call.1} parent=1 // pred_region
      _
    $region21: #{tpu_custom_call.1} parent=1 // pred_fallthru
      _
    // Predicated region
    $region22: #{tpu_custom_call.1} parent=1 // pred_check
      _
    $region23: #{tpu_custom_call.1} parent=1 // pred_check_branch
      %43 = sbr.rel (0) target = $region25
    $region24: #{tpu_custom_call.1} parent=1 // pred_region
      %45 = dma.done [#allocation4], 736
    $region25: #{tpu_custom_call.1} parent=1 // pred_fallthru
      _
    // Predicated region
    $region26: #{tpu_custom_call.1} parent=1 // pred_check
      _
    $region27: #{tpu_custom_call.1} parent=1 // pred_check_branch
      %47 = sbr.rel (0) target = $region29
    $region28: #{tpu_custom_call.1} parent=1 // pred_region
      %49 = dma.done [#allocation7], 368
    $region29: #{tpu_custom_call.1} parent=1 // pred_fallthru
      _
    %p50 = scmp.eq.s32.totalorder 0, 0
    // Predicated region
    $region30: #{tpu_custom_call.1} parent=1 // pred_check
      %p51 = pneg %p50
    $region31: #{tpu_custom_call.1} parent=1 // pred_check_branch
      %53 = sbr.rel (%p51) target = $region33
    $region32: #{tpu_custom_call.1} parent=1 // pred_region
      %v54 = vld [vmem:[%s1] sm:$0x3]
      %v55 = vld [vmem:[%s3] sm:$0x1]
      %v57 = vperm.slane %v55, 0
      %v59 = vmul.f32 %v54, %v57
      %vm60 = vcmask 1041408
      %v61 = vsel %vm60, %v59, 0.0
      %62 = vadd.xlane.f32.xlu0 %v61
      %v63 = vpop.xlane.xlu0 %62
      %s64 = sld [smem:[#allocation2]]
      %v65 = vstv %s64
      %v66 = vadd.f32 %v63, %v65
      %v68 = vlaneseq
      %v69 = vand.u32 %v68, 127
      %v70 = vperm.slane %v66, %v69
      %vm72 = vcmask 8192
      %73 = vst.msk [vmem:[#allocation8] sm:$0x1] %vm72, %v70
    $region33: #{tpu_custom_call.1} parent=1 // pred_fallthru
      _
    %v74 = vld [vmem:[#allocation3] sm:$0xff]
    %v75 = vld [vmem:[#allocation3 + $0x8] sm:$0xff]
    %v76 = vld [vmem:[#allocation3 + $0x10] sm:$0xff]
    %v77 = vld [vmem:[#allocation3 + $0x18] sm:$0xff]
    %v78 = vld [vmem:[#allocation3 + $0x20] sm:$0xff]
    %v79 = vld [vmem:[#allocation3 + $0x28] sm:$0x3f]
    %v80 = vld [vmem:[#allocation6] sm:$0xff]
    %v81 = vld [vmem:[#allocation6 + $0x8] sm:$0xff]
    %v82 = vld [vmem:[#allocation6 + $0x10] sm:$0x7f]
    %v86 = vperm.slane %v80, 0
    %v87 = vperm.slane %v80, 1
    %v88 = vperm.slane %v80, 2
    %v89 = vperm.slane %v80, 3
    %v90 = vperm.slane %v80, 4
    %v91 = vperm.slane %v80, 5
    %v92 = vperm.slane %v80, 6
    %v93 = vperm.slane %v80, 7
    %v94 = vperm.slane %v81, 0
    %v95 = vperm.slane %v81, 1
    %v96 = vperm.slane %v81, 2
    %v97 = vperm.slane %v81, 3
    %v98 = vperm.slane %v81, 4
    %v99 = vperm.slane %v81, 5
    %v100 = vperm.slane %v81, 6
    %v101 = vperm.slane %v81, 7
    %v102 = vperm.slane %v82, 0
    %v103 = vperm.slane %v82, 1
    %v104 = vperm.slane %v82, 2
    %v105 = vperm.slane %v82, 3
    %v106 = vperm.slane %v82, 4
    %v107 = vperm.slane %v82, 5
    %v108 = vperm.slane %v82, 6
    %v109 = vrot.slane %v87, 6
    %v110 = vrot.slane %v88, 4
    %v111 = vrot.slane %v89, 2
    %v112 = vrot.slane %v91, 6
    %v113 = vrot.slane %v92, 4
    %v114 = vrot.slane %v93, 2
    %v115 = vrot.slane %v95, 6
    %v116 = vrot.slane %v96, 4
    %v117 = vrot.slane %v97, 2
    %v118 = vrot.slane %v99, 6
    %v119 = vrot.slane %v100, 4
    %v120 = vrot.slane %v101, 2
    %v121 = vrot.slane %v103, 6
    %v122 = vrot.slane %v104, 4
    %v123 = vrot.slane %v105, 2
    %v124 = vrot.slane %v107, 6
    %v125 = vrot.slane %v108, 4
    %vm126 = vcmask 1041408
    %v127 = vsel %vm126, %v86, %v109
    %vm128 = vcmask 1045508
    %v129 = vsel %vm128, %v110, %v111
    %vm130 = vcmask 1043456
    %v131 = vsel %vm130, %v127, %v129
    %v132 = vsel %vm126, %v90, %v112
    %v133 = vsel %vm128, %v113, %v114
    %v134 = vsel %vm130, %v132, %v133
    %v135 = vsel %vm126, %v94, %v115
    %v136 = vsel %vm128, %v116, %v117
    %v137 = vsel %vm130, %v135, %v136
    %v138 = vsel %vm126, %v98, %v118
    %v139 = vsel %vm128, %v119, %v120
    %v140 = vsel %vm130, %v138, %v139
    %v141 = vsel %vm126, %v102, %v121
    %v142 = vsel %vm128, %v122, %v123
    %v143 = vsel %vm130, %v141, %v142
    %v144 = vsel %vm126, %v106, %v124
    %v145 = vsel %vm130, %v144, %v125
    %v152 = vmul.f32 %v74, %v131
    %v153 = vmul.f32 %v75, %v134
    %v154 = vmul.f32 %v76, %v137
    %v155 = vmul.f32 %v77, %v140
    %v156 = vmul.f32 %v78, %v143
    %v157 = vmul.f32 %v79, %v145
    %v158 = vld [vmem:[#allocation8] sm:$0x1]
    %165 = vst [vmem:[#allocation1] ss:$4 sm:$0xff] %v152
    %s166 = scalar_lea.vmem [#allocation1], 32
    %167 = vst [vmem:[%s166] ss:$4 sm:$0xff] %v153
    %v168 = vld.sshfl [vmem:[#allocation1] sm:$0xff pattern:$0x73625140]
    %v169 = vld.sshfl [vmem:[#allocation1 + $0x8] sm:$0xff pattern:$0x73625140]
    %v170 = vld.sshfl [vmem:[#allocation1 + $0x10] sm:$0xff pattern:$0x73625140]
    %v171 = vld.sshfl [vmem:[#allocation1 + $0x18] sm:$0xff pattern:$0x73625140]
    %v172 = vld.sshfl [vmem:[#allocation1 + $0x20] sm:$0xff pattern:$0x73625140]
    %v173 = vld.sshfl [vmem:[#allocation1 + $0x28] sm:$0xff pattern:$0x73625140]
    %v174 = vld.sshfl [vmem:[#allocation1 + $0x30] sm:$0xff pattern:$0x73625140]
    %v175 = vld.sshfl [vmem:[#allocation1 + $0x38] sm:$0xff pattern:$0x73625140]
    %176 = vst [vmem:[#allocation1] ss:$4 sm:$0xff] %v154
    %177 = vst [vmem:[%s166] ss:$4 sm:$0xff] %v155
    %v178 = vld.sshfl [vmem:[#allocation1] sm:$0xff pattern:$0x73625140]
    %v179 = vld.sshfl [vmem:[#allocation1 + $0x8] sm:$0xff pattern:$0x73625140]
    %v180 = vld.sshfl [vmem:[#allocation1 + $0x10] sm:$0xff pattern:$0x73625140]
    %v181 = vld.sshfl [vmem:[#allocation1 + $0x18] sm:$0xff pattern:$0x73625140]
    %v182 = vld.sshfl [vmem:[#allocation1 + $0x20] sm:$0xff pattern:$0x73625140]
    %v183 = vld.sshfl [vmem:[#allocation1 + $0x28] sm:$0xff pattern:$0x73625140]
    %v184 = vld.sshfl [vmem:[#allocation1 + $0x30] sm:$0xff pattern:$0x73625140]
    %v185 = vld.sshfl [vmem:[#allocation1 + $0x38] sm:$0xff pattern:$0x73625140]
    %186 = vst [vmem:[#allocation1] ss:$4 sm:$0xff] %v156
    %187 = vst [vmem:[%s166] ss:$4 sm:$0xff] %v157
    %v188 = vld.sshfl [vmem:[#allocation1] sm:$0xff pattern:$0x73625140]
    %v189 = vld.sshfl [vmem:[#allocation1 + $0x8] sm:$0xff pattern:$0x73625140]
    %v190 = vld.sshfl [vmem:[#allocation1 + $0x10] sm:$0xff pattern:$0x73625140]
    %v191 = vld.sshfl [vmem:[#allocation1 + $0x18] sm:$0xff pattern:$0x73625140]
    %v192 = vld.sshfl [vmem:[#allocation1 + $0x20] sm:$0xff pattern:$0x73625140]
    %v193 = vld.sshfl [vmem:[#allocation1 + $0x28] sm:$0xff pattern:$0x73625140]
    %v194 = vld.sshfl [vmem:[#allocation1 + $0x30] sm:$0xff pattern:$0x73625140]
    %v218 = vsel %vm126, %v168, 0.0
    %v219 = vsel %vm126, %v169, 0.0
    %v220 = vadd.f32 %v218, %v219
    %v221 = vsel %vm126, %v170, 0.0
    %v222 = vadd.f32 %v220, %v221
    %v223 = vsel %vm126, %v171, 0.0
    %v224 = vadd.f32 %v222, %v223
    %v225 = vsel %vm126, %v172, 0.0
    %v226 = vadd.f32 %v224, %v225
    %v227 = vsel %vm126, %v173, 0.0
    %v228 = vadd.f32 %v226, %v227
    %v229 = vsel %vm126, %v174, 0.0
    %v230 = vadd.f32 %v228, %v229
    %v231 = vsel %vm126, %v175, 0.0
    %v232 = vadd.f32 %v230, %v231
    %v233 = vsel %vm126, %v178, 0.0
    %v234 = vadd.f32 %v232, %v233
    %v235 = vsel %vm126, %v179, 0.0
    %v236 = vadd.f32 %v234, %v235
    %v237 = vsel %vm126, %v180, 0.0
    %v238 = vadd.f32 %v236, %v237
    %v239 = vsel %vm126, %v181, 0.0
    %v240 = vadd.f32 %v238, %v239
    %v241 = vsel %vm126, %v182, 0.0
    %v242 = vadd.f32 %v240, %v241
    %v243 = vsel %vm126, %v183, 0.0
    %v244 = vadd.f32 %v242, %v243
    %v245 = vsel %vm126, %v184, 0.0
    %v246 = vadd.f32 %v244, %v245
    %v247 = vsel %vm126, %v185, 0.0
    %v248 = vadd.f32 %v246, %v247
    %v249 = vsel %vm126, %v188, 0.0
    %v250 = vadd.f32 %v248, %v249
    %v251 = vsel %vm126, %v189, 0.0
    %v252 = vadd.f32 %v250, %v251
    %v253 = vsel %vm126, %v190, 0.0
    %v254 = vadd.f32 %v252, %v253
    %v255 = vsel %vm126, %v191, 0.0
    %v256 = vadd.f32 %v254, %v255
    %v257 = vsel %vm126, %v192, 0.0
    %v258 = vadd.f32 %v256, %v257
    %v259 = vsel %vm126, %v193, 0.0
    %v260 = vadd.f32 %v258, %v259
    %vm261 = vcmask 582656
    %v262 = vsel %vm261, %v194, 0.0
    %v263 = vadd.f32 %v260, %v262
    %264 = vadd.xlane.f32.xlu0 %v263
    %v265 = vpop.xlane.xlu0 %264
    %v267 = vperm.slane %v265, 0
    %v268 = vperm.slane %v265, 1
    %269 = vst [vmem:[#allocation1] ss:$9 sm:$0xff] %v267
    %s270 = scalar_lea.vmem [#allocation1], 1
    %271 = vst [vmem:[%s270] ss:$9 sm:$0xff] %v268
    %v272 = vld [vmem:[#allocation1] sm:$0xff]
    %273 = vset.pattern.permute.xlu0 0
    %274 = vperm.xlu0 %273, %v272
    %v275 = vpop.permute.xlu0 %274
    %v276 = vlaneseq
    %v277 = vand.u32 %v276, 127
    %v278 = vperm.slane %v275, %v277
    %v280 = vadd.f32 %v158, %v278
    %vm281 = vcmask 8192
    %282 = vst.msk [vmem:[#allocation8] sm:$0x1] %vm281, %v280
    // Predicated region
    $region34: #{tpu_custom_call.1} parent=1 // pred_check
      _
    $region35: #{tpu_custom_call.1} parent=1 // pred_check_branch
      %284 = sbr.rel (0) target = $region37
    $region36: #{tpu_custom_call.1} parent=1 // pred_region
      %286 = vsyncadd [#allocation5], 0
      %s288 = sshll.u32 [#allocation8], 4
      %s289 = int_to_ptr.vmem [resolvable:$true] %s288
      %s290 = sshll.u32 %s5, 4
      %s291 = int_to_ptr.hbm [resolvable:$true] %s290
      %293 = dma.vmem_to_hbm [thread:$0]  %s289, 16, %s291, [#allocation5]
    $region37: #{tpu_custom_call.1} parent=1 // pred_fallthru
      _
    // Predicated region
    $region38: #{tpu_custom_call.1} parent=1 // pred_check
      _
    $region39: #{tpu_custom_call.1} parent=1 // pred_check_branch
      %295 = sbr.rel (0) target = $region41
    $region40: #{tpu_custom_call.1} parent=1 // pred_region
      %297 = dma.done [#allocation5], 16
    $region41: #{tpu_custom_call.1} parent=1 // pred_fallthru
      _
    %298 = vsyncpa [#allocation4], 1
    %299 = vsyncpa [#allocation7], 1
    %300 = vsyncpa [#allocation5], 1

</llo_original>
